<compile_context>
chip_gen: v7x
topology: tpu7x:2x2x1
jax: 0.10.0
libtpu: 0.0.40
codegen_flags: <defaults>
</compile_context>

<pallas_src>
import functools

import jax
import jax.numpy as jnp
import numpy as np
from jax.experimental import pallas as pl
from jax.experimental.pallas import tpu as pltpu


# ---------------------------------------------------------------------------
# Small helpers
# ---------------------------------------------------------------------------
def _round_up(x, m):
    return (x + m - 1) // m * m


def _vmem_budget_bytes():
    """Per-TensorCore VMEM budget with headroom for compiler scratch."""
    cap = 64 * 1024 * 1024  # conservative fallback (valid on every generation)
    try:
        info = pltpu.get_tpu_info()
        cap = int(getattr(info, "vmem_capacity_bytes", cap))
    except Exception:
        pass
    # Leave 16 MiB headroom: ~48 MiB usable on v7x (64 MiB/TC),
    # ~112 MiB on v5e/v6e (128 MiB).
    return max(32 * 1024 * 1024, cap - 16 * 1024 * 1024)


_VMEM_BUDGET = _vmem_budget_bytes()


def _vmem_limit(need, budget):
    return int(min(max(need + (4 << 20), 32 << 20), budget))


def _pick_divisor_tile(total, max_tile):
    """Largest multiple of 128 that divides `total` and is <= max_tile."""
    best = 128
    t = 128
    while t <= min(total, max_tile):
        if total % t == 0:
            best = t
        t += 128
    return best


def _const_spec(shape, index_map, single_buffer):
    """BlockSpec for a block whose index never changes over the grid."""
    if single_buffer:
        try:
            return pl.BlockSpec(shape, index_map, pipeline_mode=pl.Buffered(1))
        except TypeError:
            pass  # older BlockSpec signature without pipeline_mode
    return pl.BlockSpec(shape, index_map)


# ---------------------------------------------------------------------------
# Parameter construction (mirrors down_projection.__init__)
# ---------------------------------------------------------------------------
def build_down_projection_params(projection_matrix, hidden_size,
                                 signal_index=0, store_index=0,
                                 dtype=jnp.float32):
    cd, big = projection_matrix.shape                       # channel_dim, larger dim
    assert big >= cd, "Call this module only for downward projection"
    nc = hidden_size // cd                                   # num_channels
    assert big % cd == 0
    assert signal_index % cd == 0 and store_index % cd == 0
    shs = signal_index // cd                                 # signal_head_start
    sts = store_index // cd                                  # store_head_start
    nu = big // cd                                           # num_useful_channels
    assert nu + shs <= nc

    # projection (Conv2D transpose=False): weight (nc, cd, cd), bias (nc, cd)
    c_proj_init = jnp.zeros((nc, cd, cd), dtype)
    for i in range(nu):
        c_proj_init = c_proj_init.at[shs + i].set(
            projection_matrix[:, i * cd:(i + 1) * cd].astype(dtype))
    W1 = jnp.transpose(c_proj_init, (0, 2, 1))               # .transpose(-1,-2)
    b1 = jnp.zeros((nc, cd), dtype)

    # channel_projection (Conv2D transpose=True): weight (cd, nc, nc), bias (cd, nc)
    W2 = jnp.zeros((cd, nc, nc), dtype)
    W2 = W2.at[:, shs:shs + nu, sts].set(1.0)
    b2 = jnp.zeros((cd, nc), dtype)
    return W1, b1, W2, b2


def expand_to_flat_operators(W1, b1, W2, b2):
    """Expand the per-channel weights into flat (H, H) operators."""
    nc, cd, _ = W1.shape
    H = nc * cd
    eye_nc = jnp.eye(nc, dtype=W1.dtype)
    eye_cd = jnp.eye(cd, dtype=W2.dtype)
    # M1[h*cd+e, k*cd+d] = W1[h,e,d] * delta(h,k)   (block-diagonal)
    M1 = jnp.einsum('hed,hk->hekd', W1, eye_nc).reshape(H, H)
    b1_flat = b1.reshape(H)                                  # index h*cd + d
    # M2[g*cd+d, h*cd+e] = W2[d,g,h] * delta(d,e)
    M2 = jnp.einsum('dgh,de->gdhe', W2, eye_cd).reshape(H, H)
    b2_flat = jnp.transpose(b2, (1, 0)).reshape(H)           # index h*cd + d -> b2[d,h]
    return M1, b1_flat, M2, b2_flat


def build_fused_operator(W1, b1, W2, b2, weight_dtype=jnp.bfloat16):
    """Fuse both affine layers: (x@M1+b1)@M2+b2 == x@M + b (one-time setup)."""
    M1, b1f, M2, b2f = expand_to_flat_operators(W1, b1, W2, b2)
    M1 = M1.astype(jnp.float32)
    M2 = M2.astype(jnp.float32)
    M = (M1 @ M2).astype(weight_dtype)
    b = (b1f.astype(jnp.float32) @ M2) + b2f.astype(jnp.float32)
    return M, b        # M in weight_dtype, bias kept f32


def prepare_down_projection(projection_matrix, hidden_size, signal_index=0,
                            store_index=0, weight_dtype=jnp.bfloat16):
    """One-time setup: build the fused operator and pad it to lane-dense Hp.

    Returns (M_padded (Hp,Hp) weight_dtype, bias (1,Hp) float32).  Padding is
    done here (once) so the per-call wrapper never touches the H^2 weight.
    """
    W1, b1, W2, b2 = build_down_projection_params(
        projection_matrix, hidden_size, signal_index, store_index)
    M, b = build_fused_operator(W1, b1, W2, b2, weight_dtype=weight_dtype)
    H = hidden_size
    # 128-lane alignment; for larger H also guarantee a 256 column/K tile.
    Hp = 128 if H <= 128 else _round_up(H, 256)
    if Hp != H:
        M = jnp.pad(M, ((0, Hp - H), (0, Hp - H)))
        b = jnp.pad(b, ((0, Hp - H),))
    return M, b.reshape(1, Hp).astype(jnp.float32)


# ---------------------------------------------------------------------------
# Pallas kernels
# ---------------------------------------------------------------------------
def _down_projection_kernel(x_ref, m_ref, b_ref, o_ref):
    # Resident-weight path: full-K matmul, dtypes already match (cast in wrapper).
    acc = jnp.dot(x_ref[...], m_ref[...], preferred_element_type=jnp.float32)
    o_ref[...] = (acc + b_ref[...]).astype(o_ref.dtype)


def _down_projection_ktiled_kernel(x_ref, m_ref, b_ref, o_ref, acc_ref):
    # K-tiled path for large Hp: f32 accumulator scratch across the K axis.
    k = pl.program_id(2)

    @pl.when(k == 0)
    def _():
        acc_ref[...] = jnp.zeros_like(acc_ref)

    acc_ref[...] += jnp.dot(x_ref[...], m_ref[...],
                            preferred_element_type=jnp.float32)

    @pl.when(k == pl.num_programs(2) - 1)
    def _():
        o_ref[...] = (acc_ref[...] + b_ref[...]).astype(o_ref.dtype)


# ---------------------------------------------------------------------------
# Tiling selection
# ---------------------------------------------------------------------------
def _fit_ktiled_tiles(tm_eff, Hp, xb, wb, ob, budget, tn0, tk0):
    tn = _pick_divisor_tile(Hp, tn0)
    tk = _pick_divisor_tile(Hp, tk0)

    def need(tm_, tn_, tk_):
        return (2 * tm_ * tk_ * xb + 2 * tk_ * tn_ * wb + 2 * tn_ * 4
                + 2 * tm_ * tn_ * ob + tm_ * tn_ * 4)

    while need(tm_eff, tn, tk) > budget:
        if tk > 128:
            tk = _pick_divisor_tile(Hp, tk // 2)
        elif tn > 128:
            tn = _pick_divisor_tile(Hp, tn // 2)
        elif tm_eff > 8:
            tm_eff = max(8, tm_eff // 2)
        else:
            break
    return tm_eff, tn, tk


# ---------------------------------------------------------------------------
# Wrapper
# ---------------------------------------------------------------------------
@functools.partial(
    jax.jit,
    static_argnames=("tm", "tn", "tk", "force_k_tiling", "single_buffer"))
def _down_projection_impl(hidden_states, M, b2d, *, tm, tn, tk,
                          force_k_tiling, single_buffer):
    orig_shape = hidden_states.shape
    H = orig_shape[-1]
    Hp = M.shape[-1]
    assert M.shape == (Hp, Hp) and b2d.shape == (1, Hp) and H <= Hp

    out_dtype = hidden_states.dtype
    xf = hidden_states.reshape(-1, H)
    if xf.dtype != M.dtype:
        xf = xf.astype(M.dtype)            # cast ONCE (bf16 production path)
    N = xf.shape[0]

    if Hp != H:                            # lane-dense hidden axis (x only; M/b pre-padded)
        xf = jnp.pad(xf, ((0, 0), (0, Hp - H)))

    # Minimal row padding (multiple of 8); partial last tile handled by cdiv grid.
    Np = _round_up(max(N, 8), 8)
    if Np != N:
        xf = jnp.pad(xf, ((0, Np - N), (0, 0)))

    xb = xf.dtype.itemsize
    wb = M.dtype.itemsize
    ob = jnp.dtype(out_dtype).itemsize
    budget = _VMEM_BUDGET

    tm_eff = tm if Np >= tm else Np        # single row tile for tiny N

    def resident_need(tm_):
        w_bufs = 1 if single_buffer else 2
        return (2 * tm_ * Hp * xb + w_bufs * Hp * Hp * wb + Hp * 4
                + 2 * tm_ * Hp * ob)

    use_resident = (not force_k_tiling) and resident_need(tm_eff) <= budget

    if use_resident:
        # Spend leftover VMEM on bigger row tiles, but keep >=2 row tiles
        # so v7x megacore has work for both TensorCores.
        while (tm_eff < 1024 and Np >= 4 * tm_eff
               and resident_need(2 * tm_eff) <= budget):
            tm_eff *= 2
        grid_r = pl.cdiv(Np, tm_eff)
        vmem_need = resident_need(tm_eff)
        cost = pl.CostEstimate(
            flops=2 * Np * Hp * Hp, transcendentals=0,
            bytes_accessed=Np * Hp * xb + Hp * Hp * wb + Np * Hp * ob + Hp * 4)
        out = pl.pallas_call(
            _down_projection_kernel,
            out_shape=jax.ShapeDtypeStruct((Np, Hp), out_dtype),
            grid=(grid_r,),
            in_specs=[
                pl.BlockSpec((tm_eff, Hp), lambda i: (i, 0)),           # x streams
                _const_spec((Hp, Hp), lambda i: (0, 0), single_buffer),  # resident M
                _const_spec((1, Hp), lambda i: (0, 0), single_buffer),   # resident bias
            ],
            out_specs=pl.BlockSpec((tm_eff, Hp), lambda i: (i, 0)),
            compiler_params=pltpu.CompilerParams(
                dimension_semantics=("parallel",),
                vmem_limit_bytes=_vmem_limit(vmem_need, budget)),
            cost_estimate=cost,
        )(xf, M, b2d)
    else:
        tm_eff, tn_eff, tk_eff = _fit_ktiled_tiles(
            tm_eff, Hp, xb, wb, ob, budget, tn, tk)
        grid_r = pl.cdiv(Np, tm_eff)
        grid_c = Hp // tn_eff
        vmem_need = (2 * tm_eff * tk_eff * xb + 2 * tk_eff * tn_eff * wb
                     + 2 * tn_eff * 4 + 2 * tm_eff * tn_eff * ob
                     + tm_eff * tn_eff * 4)
        cost = pl.CostEstimate(
            flops=2 * Np * Hp * Hp, transcendentals=0,
            bytes_accessed=(grid_c * Np * Hp * xb + grid_r * Hp * Hp * wb
                            + Np * Hp * ob + grid_r * Hp * 4))
        out = pl.pallas_call(
            _down_projection_ktiled_kernel,
            out_shape=jax.ShapeDtypeStruct((Np, Hp), out_dtype),
            grid=(grid_r, grid_c, Hp // tk_eff),
            in_specs=[
                pl.BlockSpec((tm_eff, tk_eff), lambda i, j, k: (i, k)),
                pl.BlockSpec((tk_eff, tn_eff), lambda i, j, k: (k, j)),
                pl.BlockSpec((1, tn_eff), lambda i, j, k: (0, j)),
            ],
            out_specs=pl.BlockSpec((tm_eff, tn_eff), lambda i, j, k: (i, j)),
            scratch_shapes=[pltpu.VMEM((tm_eff, tn_eff), jnp.float32)],
            compiler_params=pltpu.CompilerParams(
                dimension_semantics=("parallel", "parallel", "arbitrary"),
                vmem_limit_bytes=_vmem_limit(vmem_need, budget)),
            cost_estimate=cost,
        )(xf, M, b2d)

    return out[:N, :H].reshape(orig_shape)


def down_projection_pallas(hidden_states, M, b2d, *, tm=256, tn=512, tk=512,
                           force_k_tiling=False):
    """Apply the fused down_projection operator (prepared by prepare_down_projection)."""
    try:
        return _down_projection_impl(hidden_states, M, b2d, tm=tm, tn=tn, tk=tk,
                                     force_k_tiling=force_k_tiling,
                                     single_buffer=True)
    except Exception:
        # Fallback if this JAX build rejects pl.Buffered(1) single-buffering.
        return _down_projection_impl(hidden_states, M, b2d, tm=tm, tn=tn, tk=tk,
                                     force_k_tiling=force_k_tiling,
                                     single_buffer=False)


# ---------------------------------------------------------------------------
# Pure-JAX reference mirroring the PyTorch forward (for validation only)
# ---------------------------------------------------------------------------
def _conv2d_ref(x, weight, bias, nf, nx, transpose):
    size_out = x.shape[:-1] + (nf * nx,)
    xf = x.reshape(-1, nf, nx)
    if not transpose:
        y = jnp.einsum('nie,ied->nid', xf, weight) + bias
        return y.reshape(size_out)
    xt = jnp.transpose(xf.reshape(-1, nf, 1, nx), (0, 3, 2, 1))
    r = jnp.einsum('ndog,dgh->ndoh', xt, weight)[:, :, 0, :] + bias
    r = jnp.transpose(r, (0, 2, 1))
    return r.reshape(size_out)


def down_projection_ref(x, W1, b1, W2, b2):
    nc, cd, _ = W1.shape
    y1 = _conv2d_ref(x, W1, b1, nf=nc, nx=cd, transpose=False)
    y2 = _conv2d_ref(y1, W2, b2, nf=nc, nx=cd, transpose=True)
    return y2


# ---------------------------------------------------------------------------
if __name__ == "__main__":
    key = jax.random.PRNGKey(0)
    k_pm, k_x, k_pm2, k_x2 = jax.random.split(key, 4)

    # ---- Test 1: small demo config (resident-weight path) -------------------
    # hidden=32, channel_dim=8 -> num_channels=4; projection_matrix (8, 16)
    # -> num_useful_channels=2; signal_index=8 (head 1), store_index=0 (head 0)
    batch, seq, hidden = 2, 8, 32
    channel_dim, big_dim = 8, 16
    signal_index, store_index = 8, 0

    projection_matrix = jax.random.normal(k_pm, (channel_dim, big_dim), jnp.float32)
    hidden_states = jax.random.normal(k_x, (batch, seq, hidden), jnp.float32)

    W1, b1, W2, b2 = build_down_projection_params(
        projection_matrix, hidden, signal_index, store_index)
    ref = down_projection_ref(hidden_states, W1, b1, W2, b2)

    # f32 fused weights: tight check against the PyTorch-style reference.
    M32, b32 = prepare_down_projection(projection_matrix, hidden, signal_index,
                                       store_index, weight_dtype=jnp.float32)
    out_f32 = jax.block_until_ready(down_projection_pallas(hidden_states, M32, b32))
    np.testing.assert_allclose(np.asarray(out_f32), np.asarray(ref),
                               rtol=1e-4, atol=1e-4)

    # bf16 fused weights (production / MXU-peak path), f32 accumulation.
    Mbf, bbf = prepare_down_projection(projection_matrix, hidden, signal_index,
                                       store_index, weight_dtype=jnp.bfloat16)
    out_bf16 = jax.block_until_ready(down_projection_pallas(hidden_states, Mbf, bbf))
    np.testing.assert_allclose(np.asarray(out_bf16), np.asarray(ref),
                               rtol=1e-1, atol=1e-1)

    # ---- Test 2: larger config, force the K-tiled accumulator path ----------
    batch2, seq2, hidden2 = 4, 75, 512       # N=300 -> partial last row tile
    cd2, big2 = 64, 128
    sig2, sto2 = 64, 0
    pm2 = jax.random.normal(k_pm2, (cd2, big2), jnp.float32)
    hs2 = jax.random.normal(k_x2, (batch2, seq2, hidden2), jnp.float32)

    W1b, b1b, W2b, b2b = build_down_projection_params(pm2, hidden2, sig2, sto2)
    ref2 = down_projection_ref(hs2, W1b, b1b, W2b, b2b)

    M2p, b2p = prepare_down_projection(pm2, hidden2, sig2, sto2,
                                       weight_dtype=jnp.float32)
    out2 = jax.block_until_ready(
        down_projection_pallas(hs2, M2p, b2p, tm=256, tn=256, tk=256,
                               force_k_tiling=True))
    np.testing.assert_allclose(np.asarray(out2), np.asarray(ref2),
                               rtol=1e-4, atol=1e-4)

    print("KERNEL_OK")
</pallas_src>

<mosaic_0001>
module attributes {stable_mosaic.version = 11 : i64} {
  func.func @_down_projection_kernel(%arg0: i32, %arg1: memref<16x128xf32, #tpu.memory_space<vmem>>, %arg2: memref<128x128xf32, #tpu.memory_space<vmem>>, %arg3: memref<1x128xf32, #tpu.memory_space<vmem>>, %arg4: memref<16x128xf32, #tpu.memory_space<vmem>>) attributes {dimension_semantics = [#tpu.dimension_semantics<parallel>], iteration_bounds = array<i64: 1>, scalar_prefetch = 0 : i64, scratch_operands = 0 : i64, tpu.core_type = #tpu.core_type<tc>, window_params = [{transform_indices = @transform_0, window_bounds = array<i64: 16, 128>}, {pipeline_mode = #tpu.pipeline_mode<synchronous>, transform_indices = @transform_1, window_bounds = array<i64: 128, 128>}, {pipeline_mode = #tpu.pipeline_mode<synchronous>, transform_indices = @transform_2, window_bounds = array<i64: 1, 128>}, {transform_indices = @transform_3, window_bounds = array<i64: 16, 128>}]} {
    %c0 = arith.constant 0 : index
    %c0_0 = arith.constant 0 : index
    %0 = vector.load %arg1[%c0, %c0_0] : memref<16x128xf32, #tpu.memory_space<vmem>>, vector<16x128xf32>
    %c0_1 = arith.constant 0 : index
    %c0_2 = arith.constant 0 : index
    %1 = vector.load %arg2[%c0_1, %c0_2] : memref<128x128xf32, #tpu.memory_space<vmem>>, vector<128x128xf32>
    %cst = arith.constant dense<0.000000e+00> : vector<16x128xf32>
    %2 = tpu.matmul %0, %1, %cst {dimension_numbers = #tpu.dot_dimension_numbers<[1], [0], [0], [1], [0, 0, 1, 1], [], []>} : vector<16x128xf32>, vector<128x128xf32>, vector<16x128xf32> -> vector<16x128xf32>
    %c0_3 = arith.constant 0 : index
    %c0_4 = arith.constant 0 : index
    %3 = vector.load %arg3[%c0_3, %c0_4] : memref<1x128xf32, #tpu.memory_space<vmem>>, vector<1x128xf32>
    %4 = vector.broadcast %3 : vector<1x128xf32> to vector<16x128xf32>
    %5 = arith.addf %2, %4 : vector<16x128xf32>
    %c0_5 = arith.constant 0 : index
    %c0_6 = arith.constant 0 : index
    %6 = vector.load %arg4[%c0_5, %c0_6] : memref<16x128xf32, #tpu.memory_space<vmem>>, vector<16x128xf32>
    tpu.vector_store %arg4[%c0_5, %c0_6], %5 {strides = array<i32>} : memref<16x128xf32, #tpu.memory_space<vmem>>, vector<16x128xf32>,
    return
  }
  func.func @transform_0(%arg0: i32) -> (i32, i32) {
    %c0_i32 = arith.constant 0 : i32
    %c0_i32_0 = arith.constant 0 : i32
    return %arg0, %c0_i32 : i32, i32
  }
  func.func @transform_1(%arg0: i32) -> (i32, i32) {
    %c0_i32 = arith.constant 0 : i32
    %c0_i32_0 = arith.constant 0 : i32
    %c0_i32_1 = arith.constant 0 : i32
    return %c0_i32, %c0_i32_0 : i32, i32
  }
  func.func @transform_2(%arg0: i32) -> (i32, i32) {
    %c0_i32 = arith.constant 0 : i32
    %c0_i32_0 = arith.constant 0 : i32
    %c0_i32_1 = arith.constant 0 : i32
    return %c0_i32, %c0_i32_0 : i32, i32
  }
  func.func @transform_3(%arg0: i32) -> (i32, i32) {
    %c0_i32 = arith.constant 0 : i32
    %c0_i32_0 = arith.constant 0 : i32
    return %arg0, %c0_i32 : i32, i32
  }
}

module attributes {stable_mosaic.version = 11 : i64} {
  func.func @_down_projection_kernel(%arg0: i32, %arg1: memref<16x128xf32, #tpu.memory_space<vmem>>, %arg2: memref<128x128xf32, #tpu.memory_space<vmem>>, %arg3: memref<1x128xf32, #tpu.memory_space<vmem>>, %arg4: memref<16x128xf32, #tpu.memory_space<vmem>>) attributes {dimension_semantics = [#tpu.dimension_semantics<parallel>], iteration_bounds = array<i64: 1>, scalar_prefetch = 0 : i64, scratch_operands = 0 : i64, tpu.core_type = #tpu.core_type<tc>, window_params = [{transform_indices = @transform_0, window_bounds = array<i64: 16, 128>}, {pipeline_mode = #tpu.pipeline_mode<synchronous>, transform_indices = @transform_1, window_bounds = array<i64: 128, 128>}, {pipeline_mode = #tpu.pipeline_mode<synchronous>, transform_indices = @transform_2, window_bounds = array<i64: 1, 128>}, {transform_indices = @transform_3, window_bounds = array<i64: 16, 128>}]} {
    %c0 = arith.constant 0 : index
    %c0_0 = arith.constant 0 : index
    %0 = vector.load %arg1[%c0, %c0_0] : memref<16x128xf32, #tpu.memory_space<vmem>>, vector<16x128xf32>
    %c0_1 = arith.constant 0 : index
    %c0_2 = arith.constant 0 : index
    %1 = vector.load %arg2[%c0_1, %c0_2] : memref<128x128xf32, #tpu.memory_space<vmem>>, vector<128x128xf32>
    %cst = arith.constant dense<0.000000e+00> : vector<16x128xf32>
    %2 = tpu.matmul %0, %1, %cst {dimension_numbers = #tpu.dot_dimension_numbers<[1], [0], [0], [1], [0, 0, 1, 1], [], []>} : vector<16x128xf32>, vector<128x128xf32>, vector<16x128xf32> -> vector<16x128xf32>
    %c0_3 = arith.constant 0 : index
    %c0_4 = arith.constant 0 : index
    %3 = vector.load %arg3[%c0_3, %c0_4] : memref<1x128xf32, #tpu.memory_space<vmem>>, vector<1x128xf32>
    %4 = vector.broadcast %3 : vector<1x128xf32> to vector<16x128xf32>
    %5 = arith.addf %2, %4 : vector<16x128xf32>
    %c0_5 = arith.constant 0 : index
    %c0_6 = arith.constant 0 : index
    %6 = vector.load %arg4[%c0_5, %c0_6] : memref<16x128xf32, #tpu.memory_space<vmem>>, vector<16x128xf32>
    tpu.vector_store %arg4[%c0_5, %c0_6], %5 {strides = array<i32>} : memref<16x128xf32, #tpu.memory_space<vmem>>, vector<16x128xf32>,
    return
  }
  func.func @transform_0(%arg0: i32) -> (i32, i32) {
    %c0_i32 = arith.constant 0 : i32
    %c0_i32_0 = arith.constant 0 : i32
    return %arg0, %c0_i32 : i32, i32
  }
  func.func @transform_1(%arg0: i32) -> (i32, i32) {
    %c0_i32 = arith.constant 0 : i32
    %c0_i32_0 = arith.constant 0 : i32
    %c0_i32_1 = arith.constant 0 : i32
    return %c0_i32, %c0_i32_0 : i32, i32
  }
  func.func @transform_2(%arg0: i32) -> (i32, i32) {
    %c0_i32 = arith.constant 0 : i32
    %c0_i32_0 = arith.constant 0 : i32
    %c0_i32_1 = arith.constant 0 : i32
    return %c0_i32, %c0_i32_0 : i32, i32
  }
  func.func @transform_3(%arg0: i32) -> (i32, i32) {
    %c0_i32 = arith.constant 0 : i32
    %c0_i32_0 = arith.constant 0 : i32
    return %arg0, %c0_i32 : i32, i32
  }
}

</mosaic_0001>

<llo_original>
// kernel: _down_projection_impl.1
$region0: #{_down_projection_impl.1}
  #allocation0 [shape = 'u32[]', space=smem, size = 0x4, offset = 0x4, fixed_abs, tag = 'smem constant byte address 0x4 - core index']
  #allocation1 [shape = 'u32[144,128]{1,0:T(1,128)}', space=vmem, size = 0x12000, scoped, tag = 'internal scratch']
  %s0 = inlined_call_operand.vmem [shape: f32[16,128], index: 0, kind: input, shape index: {}]
  %s1 = inlined_call_operand.hbm [shape: f32[128,128], index: 1, kind: input, shape index: {}]
  %s2 = inlined_call_operand.vmem [shape: f32[1,128], index: 2, kind: input, shape index: {}]
  %s3 = inlined_call_operand.vmem [shape: f32[16,128], index: 3, kind: output, shape index: {}]
  %s4 = sld [smem:[#allocation0]]
  $region26: #{_down_projection_impl.1} parent=0
    _
  %s6 = ssub.s32 1, %s4
  %s7 = scalar_select 0, %s6, %s4
  $region1: #{_down_projection_impl.1} parent=0
    #allocation2 [shape = 'u8[65536]{0}', space=vmem, size = 0x10000, scoped, tag = 'input window, operand 1, single buffered']
    #allocation3 [shape = 's32[1]{0}', space=sflag, size = 0x4, scoped, tag = 'scoped memory for _down_projection_impl.1']
    %8 = vsyncpa [#allocation3], 0
    // Predicated region
    $region2: #{_down_projection_impl.1} parent=1 // pred_check
      _
    $region3: #{_down_projection_impl.1} parent=1 // pred_check_branch
      %10 = sbr.rel (0) target = $region5
    $region4: #{_down_projection_impl.1} parent=1 // pred_region
      _
    $region5: #{_down_projection_impl.1} parent=1 // pred_fallthru
      _
    // Predicated region
    $region6: #{_down_projection_impl.1} parent=1 // pred_check
      _
    $region7: #{_down_projection_impl.1} parent=1 // pred_check_branch
      %12 = sbr.rel (0) target = $region9
    $region8: #{_down_projection_impl.1} parent=1 // pred_region
      %s14 = ssub.s32 2048, 2048
      %15 = vsyncadd [#allocation3], %s14
      %s16 = sshll.u32 [#allocation2], 4
      %s17 = int_to_ptr.vmem [resolvable:$true] %s16
      %22 = dma.hbm_to_vmem [thread:$0]  %s1, 2048, %s17, [#allocation3], 128, 128, 8
    $region9: #{_down_projection_impl.1} parent=1 // pred_fallthru
      _
    // Predicated region
    $region10: #{_down_projection_impl.1} parent=1 // pred_check
      _
    $region11: #{_down_projection_impl.1} parent=1 // pred_check_branch
      %24 = sbr.rel (0) target = $region13
    $region12: #{_down_projection_impl.1} parent=1 // pred_region
      _
    $region13: #{_down_projection_impl.1} parent=1 // pred_fallthru
      _
    // Predicated region
    $region14: #{_down_projection_impl.1} parent=1 // pred_check
      _
    $region15: #{_down_projection_impl.1} parent=1 // pred_check_branch
      %26 = sbr.rel (0) target = $region17
    $region16: #{_down_projection_impl.1} parent=1 // pred_region
      %27 = dma.done [#allocation3], 2048
    $region17: #{_down_projection_impl.1} parent=1 // pred_fallthru
      _
    %v28 = vld [vmem:[%s0] sm:$0xff]
    %v29 = vld [vmem:[%s0 + $0x8] sm:$0xff]
    %v30 = vld [vmem:[#allocation2] sm:$0xff]
    %v31 = vld [vmem:[#allocation2 + $0x8] sm:$0xff]
    %v32 = vld [vmem:[#allocation2 + $0x10] sm:$0xff]
    %v33 = vld [vmem:[#allocation2 + $0x18] sm:$0xff]
    %v34 = vld [vmem:[#allocation2 + $0x20] sm:$0xff]
    %v35 = vld [vmem:[#allocation2 + $0x28] sm:$0xff]
    %v36 = vld [vmem:[#allocation2 + $0x30] sm:$0xff]
    %v37 = vld [vmem:[#allocation2 + $0x38] sm:$0xff]
    %v38 = vld [vmem:[#allocation2 + $0x40] sm:$0xff]
    %v39 = vld [vmem:[#allocation2 + $0x48] sm:$0xff]
    %v40 = vld [vmem:[#allocation2 + $0x50] sm:$0xff]
    %v41 = vld [vmem:[#allocation2 + $0x58] sm:$0xff]
    %v42 = vld [vmem:[#allocation2 + $0x60] sm:$0xff]
    %v43 = vld [vmem:[#allocation2 + $0x68] sm:$0xff]
    %v44 = vld [vmem:[#allocation2 + $0x70] sm:$0xff]
    %v45 = vld [vmem:[#allocation2 + $0x78] sm:$0xff]
    %v46 = vld [vmem:[%s2] sm:$0x1]
    %v48 = vlaneseq
    %v49 = vshrl.u32 %v48, 7
    %v50 = vsub.s32 0, %v49
    %v51 = vrot.slane %v46, %v50
    %53 = vmatprep.subr.mxu0 0.0
    %54 = vmatpush1.msra.mxu0 %v30
    %55 = vmatprep.subr.mxu0 0.0
    %56 = vmatpush1.msra.mxu0 %v31
    %57 = vmatprep.subr.mxu0 0.0
    %58 = vmatpush1.msra.mxu0 %v32
    %59 = vmatprep.subr.mxu0 0.0
    %60 = vmatpush1.msra.mxu0 %v33
    %61 = vmatprep.subr.mxu0 0.0
    %62 = vmatpush1.msra.mxu0 %v34
    %63 = vmatprep.subr.mxu0 0.0
    %64 = vmatpush1.msra.mxu0 %v35
    %65 = vmatprep.subr.mxu0 0.0
    %66 = vmatpush1.msra.mxu0 %v36
    %67 = vmatprep.subr.mxu0 0.0
    %68 = vmatpush1.msra.mxu0 %v37
    %69 = vmatprep.subr.mxu0 0.0
    %70 = vmatpush1.msra.mxu0 %v38
    %71 = vmatprep.subr.mxu0 0.0
    %72 = vmatpush1.msra.mxu0 %v39
    %73 = vmatprep.subr.mxu0 0.0
    %74 = vmatpush1.msra.mxu0 %v40
    %75 = vmatprep.subr.mxu0 0.0
    %76 = vmatpush1.msra.mxu0 %v41
    %77 = vmatprep.subr.mxu0 0.0
    %78 = vmatpush1.msra.mxu0 %v42
    %79 = vmatprep.subr.mxu0 0.0
    %80 = vmatpush1.msra.mxu0 %v43
    %81 = vmatprep.subr.mxu0 0.0
    %82 = vmatpush1.msra.mxu0 %v44
    %83 = vmatprep.subr.mxu0 0.0
    %84 = vmatpush1.msra.mxu0 %v45
    %85 = vmatprep.subr.mxu0 0.0
    %86 = vmatpush1.msra.mxu0 0.0
    %87 = vmatprep.subr.mxu0 0.0
    %88 = vmatpush1.msra.mxu0 0.0
    %89 = vmatprep.subr.mxu0 0.0
    %90 = vmatpush1.msra.mxu0 0.0
    %91 = vmatprep.subr.mxu0 0.0
    %92 = vmatpush1.msra.mxu0 0.0
    %93 = vmatprep.subr.mxu0 0.0
    %94 = vmatpush1.msra.mxu0 0.0
    %95 = vmatprep.subr.mxu0 0.0
    %96 = vmatpush1.msra.mxu0 0.0
    %97 = vmatprep.subr.mxu0 0.0
    %98 = vmatpush1.msra.mxu0 0.0
    %99 = vmatprep.subr.mxu0 0.0
    %100 = vmatpush1.msra.mxu0 0.0
    %101 = vmatprep.subr.mxu0 0.0
    %102 = vmatpush1.msra.mxu0 0.0
    %103 = vmatprep.subr.mxu0 0.0
    %104 = vmatpush1.msra.mxu0 0.0
    %105 = vmatprep.subr.mxu0 0.0
    %106 = vmatpush1.msra.mxu0 0.0
    %107 = vmatprep.subr.mxu0 0.0
    %108 = vmatpush1.msra.mxu0 0.0
    %109 = vmatprep.subr.mxu0 0.0
    %110 = vmatpush1.msra.mxu0 0.0
    %111 = vmatprep.subr.mxu0 0.0
    %112 = vmatpush1.msra.mxu0 0.0
    %113 = vmatprep.subr.mxu0 0.0
    %114 = vmatpush1.msra.mxu0 0.0
    %115 = vmatprep.subr.mxu0 0.0
    %116 = vmatpush1.msra.mxu0 0.0
    %117 = vmatprep.mubr.f32.mxu0 0.0
    %118 = vmatmul.mubr.f32.gmra.mrb[0].mxu0 %v28
    %v119 = vpop.f32.mrb[0].mxu0
    %v120 = vadd.f32 %v51, %v119
    %v121 = vpop.f32.mrb[0].mxu0
    %122 = vmatprep.mubr.f32.mxu0 0.0
    %123 = vmatmul.mubr.f32.gmra.mrb[0].mxu0 %v29
    %v124 = vpop.f32.mrb[0].mxu0
    %v125 = vadd.f32 %v51, %v124
    %v126 = vpop.f32.mrb[0].mxu0
    %127 = vdwg.mxu0
    %128 = vst [vmem:[%s3] sm:$0xff] %v120
    %129 = vst [vmem:[%s3 + $0x8] sm:$0xff] %v125
    // Predicated region
    $region18: #{_down_projection_impl.1} parent=1 // pred_check
      _
    $region19: #{_down_projection_impl.1} parent=1 // pred_check_branch
      %131 = sbr.rel (0) target = $region21
    $region20: #{_down_projection_impl.1} parent=1 // pred_region
      _
    $region21: #{_down_projection_impl.1} parent=1 // pred_fallthru
      _
    // Predicated region
    $region22: #{_down_projection_impl.1} parent=1 // pred_check
      _
    $region23: #{_down_projection_impl.1} parent=1 // pred_check_branch
      %133 = sbr.rel (0) target = $region25
    $region24: #{_down_projection_impl.1} parent=1 // pred_region
      _
    $region25: #{_down_projection_impl.1} parent=1 // pred_fallthru
      _
    %134 = vsyncpa [#allocation3], 1

// kernel: _down_projection_impl.1
$region0: #{_down_projection_impl.1}
  #allocation0 [shape = 'u32[]', space=smem, size = 0x4, offset = 0x4, fixed_abs, tag = 'smem constant byte address 0x4 - core index']
  #allocation1 [shape = 'u32[144,128]{1,0:T(1,128)}', space=vmem, size = 0x12000, scoped, tag = 'internal scratch']
  %s0 = inlined_call_operand.vmem [shape: f32[16,128], index: 0, kind: input, shape index: {}]
  %s1 = inlined_call_operand.hbm [shape: f32[128,128], index: 1, kind: input, shape index: {}]
  %s2 = inlined_call_operand.vmem [shape: f32[1,128], index: 2, kind: input, shape index: {}]
  %s3 = inlined_call_operand.vmem [shape: f32[16,128], index: 3, kind: output, shape index: {}]
  %s4 = sld [smem:[#allocation0]]
  $region26: #{_down_projection_impl.1} parent=0
    _
  %s6 = ssub.s32 1, %s4
  %s7 = scalar_select 0, %s6, %s4
  $region1: #{_down_projection_impl.1} parent=0
    #allocation2 [shape = 'u8[65536]{0}', space=vmem, size = 0x10000, scoped, tag = 'input window, operand 1, single buffered']
    #allocation3 [shape = 's32[1]{0}', space=sflag, size = 0x4, scoped, tag = 'scoped memory for _down_projection_impl.1']
    %8 = vsyncpa [#allocation3], 0
    // Predicated region
    $region2: #{_down_projection_impl.1} parent=1 // pred_check
      _
    $region3: #{_down_projection_impl.1} parent=1 // pred_check_branch
      %10 = sbr.rel (0) target = $region5
    $region4: #{_down_projection_impl.1} parent=1 // pred_region
      _
    $region5: #{_down_projection_impl.1} parent=1 // pred_fallthru
      _
    // Predicated region
    $region6: #{_down_projection_impl.1} parent=1 // pred_check
      _
    $region7: #{_down_projection_impl.1} parent=1 // pred_check_branch
      %12 = sbr.rel (0) target = $region9
    $region8: #{_down_projection_impl.1} parent=1 // pred_region
      %s14 = ssub.s32 2048, 2048
      %15 = vsyncadd [#allocation3], %s14
      %s16 = sshll.u32 [#allocation2], 4
      %s17 = int_to_ptr.vmem [resolvable:$true] %s16
      %22 = dma.hbm_to_vmem [thread:$0]  %s1, 2048, %s17, [#allocation3], 128, 128, 8
    $region9: #{_down_projection_impl.1} parent=1 // pred_fallthru
      _
    // Predicated region
    $region10: #{_down_projection_impl.1} parent=1 // pred_check
      _
    $region11: #{_down_projection_impl.1} parent=1 // pred_check_branch
      %24 = sbr.rel (0) target = $region13
    $region12: #{_down_projection_impl.1} parent=1 // pred_region
      _
    $region13: #{_down_projection_impl.1} parent=1 // pred_fallthru
      _
    // Predicated region
    $region14: #{_down_projection_impl.1} parent=1 // pred_check
      _
    $region15: #{_down_projection_impl.1} parent=1 // pred_check_branch
      %26 = sbr.rel (0) target = $region17
    $region16: #{_down_projection_impl.1} parent=1 // pred_region
      %27 = dma.done [#allocation3], 2048
    $region17: #{_down_projection_impl.1} parent=1 // pred_fallthru
      _
    %v28 = vld [vmem:[%s0] sm:$0xff]
    %v29 = vld [vmem:[%s0 + $0x8] sm:$0xff]
    %v30 = vld [vmem:[#allocation2] sm:$0xff]
    %v31 = vld [vmem:[#allocation2 + $0x8] sm:$0xff]
    %v32 = vld [vmem:[#allocation2 + $0x10] sm:$0xff]
    %v33 = vld [vmem:[#allocation2 + $0x18] sm:$0xff]
    %v34 = vld [vmem:[#allocation2 + $0x20] sm:$0xff]
    %v35 = vld [vmem:[#allocation2 + $0x28] sm:$0xff]
    %v36 = vld [vmem:[#allocation2 + $0x30] sm:$0xff]
    %v37 = vld [vmem:[#allocation2 + $0x38] sm:$0xff]
    %v38 = vld [vmem:[#allocation2 + $0x40] sm:$0xff]
    %v39 = vld [vmem:[#allocation2 + $0x48] sm:$0xff]
    %v40 = vld [vmem:[#allocation2 + $0x50] sm:$0xff]
    %v41 = vld [vmem:[#allocation2 + $0x58] sm:$0xff]
    %v42 = vld [vmem:[#allocation2 + $0x60] sm:$0xff]
    %v43 = vld [vmem:[#allocation2 + $0x68] sm:$0xff]
    %v44 = vld [vmem:[#allocation2 + $0x70] sm:$0xff]
    %v45 = vld [vmem:[#allocation2 + $0x78] sm:$0xff]
    %v46 = vld [vmem:[%s2] sm:$0x1]
    %v48 = vlaneseq
    %v49 = vshrl.u32 %v48, 7
    %v50 = vsub.s32 0, %v49
    %v51 = vrot.slane %v46, %v50
    %53 = vmatprep.subr.mxu0 0.0
    %54 = vmatpush1.msra.mxu0 %v30
    %55 = vmatprep.subr.mxu0 0.0
    %56 = vmatpush1.msra.mxu0 %v31
    %57 = vmatprep.subr.mxu0 0.0
    %58 = vmatpush1.msra.mxu0 %v32
    %59 = vmatprep.subr.mxu0 0.0
    %60 = vmatpush1.msra.mxu0 %v33
    %61 = vmatprep.subr.mxu0 0.0
    %62 = vmatpush1.msra.mxu0 %v34
    %63 = vmatprep.subr.mxu0 0.0
    %64 = vmatpush1.msra.mxu0 %v35
    %65 = vmatprep.subr.mxu0 0.0
    %66 = vmatpush1.msra.mxu0 %v36
    %67 = vmatprep.subr.mxu0 0.0
    %68 = vmatpush1.msra.mxu0 %v37
    %69 = vmatprep.subr.mxu0 0.0
    %70 = vmatpush1.msra.mxu0 %v38
    %71 = vmatprep.subr.mxu0 0.0
    %72 = vmatpush1.msra.mxu0 %v39
    %73 = vmatprep.subr.mxu0 0.0
    %74 = vmatpush1.msra.mxu0 %v40
    %75 = vmatprep.subr.mxu0 0.0
    %76 = vmatpush1.msra.mxu0 %v41
    %77 = vmatprep.subr.mxu0 0.0
    %78 = vmatpush1.msra.mxu0 %v42
    %79 = vmatprep.subr.mxu0 0.0
    %80 = vmatpush1.msra.mxu0 %v43
    %81 = vmatprep.subr.mxu0 0.0
    %82 = vmatpush1.msra.mxu0 %v44
    %83 = vmatprep.subr.mxu0 0.0
    %84 = vmatpush1.msra.mxu0 %v45
    %85 = vmatprep.subr.mxu0 0.0
    %86 = vmatpush1.msra.mxu0 0.0
    %87 = vmatprep.subr.mxu0 0.0
    %88 = vmatpush1.msra.mxu0 0.0
    %89 = vmatprep.subr.mxu0 0.0
    %90 = vmatpush1.msra.mxu0 0.0
    %91 = vmatprep.subr.mxu0 0.0
    %92 = vmatpush1.msra.mxu0 0.0
    %93 = vmatprep.subr.mxu0 0.0
    %94 = vmatpush1.msra.mxu0 0.0
    %95 = vmatprep.subr.mxu0 0.0
    %96 = vmatpush1.msra.mxu0 0.0
    %97 = vmatprep.subr.mxu0 0.0
    %98 = vmatpush1.msra.mxu0 0.0
    %99 = vmatprep.subr.mxu0 0.0
    %100 = vmatpush1.msra.mxu0 0.0
    %101 = vmatprep.subr.mxu0 0.0
    %102 = vmatpush1.msra.mxu0 0.0
    %103 = vmatprep.subr.mxu0 0.0
    %104 = vmatpush1.msra.mxu0 0.0
    %105 = vmatprep.subr.mxu0 0.0
    %106 = vmatpush1.msra.mxu0 0.0
    %107 = vmatprep.subr.mxu0 0.0
    %108 = vmatpush1.msra.mxu0 0.0
    %109 = vmatprep.subr.mxu0 0.0
    %110 = vmatpush1.msra.mxu0 0.0
    %111 = vmatprep.subr.mxu0 0.0
    %112 = vmatpush1.msra.mxu0 0.0
    %113 = vmatprep.subr.mxu0 0.0
    %114 = vmatpush1.msra.mxu0 0.0
    %115 = vmatprep.subr.mxu0 0.0
    %116 = vmatpush1.msra.mxu0 0.0
    %117 = vmatprep.mubr.f32.mxu0 0.0
    %118 = vmatmul.mubr.f32.gmra.mrb[0].mxu0 %v28
    %v119 = vpop.f32.mrb[0].mxu0
    %v120 = vadd.f32 %v51, %v119
    %v121 = vpop.f32.mrb[0].mxu0
    %122 = vmatprep.mubr.f32.mxu0 0.0
    %123 = vmatmul.mubr.f32.gmra.mrb[0].mxu0 %v29
    %v124 = vpop.f32.mrb[0].mxu0
    %v125 = vadd.f32 %v51, %v124
    %v126 = vpop.f32.mrb[0].mxu0
    %127 = vdwg.mxu0
    %128 = vst [vmem:[%s3] sm:$0xff] %v120
    %129 = vst [vmem:[%s3 + $0x8] sm:$0xff] %v125
    // Predicated region
    $region18: #{_down_projection_impl.1} parent=1 // pred_check
      _
    $region19: #{_down_projection_impl.1} parent=1 // pred_check_branch
      %131 = sbr.rel (0) target = $region21
    $region20: #{_down_projection_impl.1} parent=1 // pred_region
      _
    $region21: #{_down_projection_impl.1} parent=1 // pred_fallthru
      _
    // Predicated region
    $region22: #{_down_projection_impl.1} parent=1 // pred_check
      _
    $region23: #{_down_projection_impl.1} parent=1 // pred_check_branch
      %133 = sbr.rel (0) target = $region25
    $region24: #{_down_projection_impl.1} parent=1 // pred_region
      _
    $region25: #{_down_projection_impl.1} parent=1 // pred_fallthru
      _
    %134 = vsyncpa [#allocation3], 1

</llo_original>
